<compile_context>
chip_gen: v6e
topology: v6e:2x2x1
jax: 0.10.0
libtpu: 0.0.40
codegen_flags: <defaults>
</compile_context>

<pallas_src>
import functools

import jax
import jax.numpy as jnp
from jax.experimental import pallas as pl
from jax.experimental.pallas import tpu as pltpu

# ---- "config" constants (cfg.TRAIN.*) --------------------------------------
LABEL_EMB_NUM = 32      # cfg.TRAIN.LABEL_EMB_NUM
ATT_EMB_NUM = 32        # cfg.TRAIN.ATT_EMB_NUM
BETA = 10.0             # cfg.TRAIN.SMOOTH.BETA

# ---- module hyper-params (small, deterministic) -----------------------------
VIP_ATTR_NUM = 16
SPLIT_NUM = 8
BATCH = 2

S_EMB_NUM = ATT_EMB_NUM + LABEL_EMB_NUM          # 64
S_HALF = S_EMB_NUM // 2                          # 32
S_QUARTER = S_EMB_NUM // 4                       # 16


# ---- Pallas kernel -----------------------------------------------------------
def label_encoder_kernel(lab_ref, attr_pad_ref, wpack_ref, w2pack_ref, pool_ref,
                         seq_out_ref, glob_out_ref, *, batch, split):
    # attr_pad_ref : (S+V+1, B*S)  = [zeros(S) ; attrᵀ ; ones(1)]   (f32)
    # lab_ref      : (1, B*S)      label tiled across batch         (i32)
    # wpack_ref    : (s_half+1, S+V+1)  pre-fused layer-1 weights + pass-through row
    # w2pack_ref   : (s_quarter, s_half+1)  [w2 | b2]ᵀ
    # pool_ref     : (B*S, B)      constant mean-pooling matrix (1/split blocks)
    svb, rows = attr_pad_ref.shape

    # onehotᵀ built in-kernel: (sublane_iota == label row).  Rows >= split can
    # never match (labels ∈ [0, split)), so adding onto the zero-padded attr
    # slab yields lhs1ᵀ = [onehotᵀ ; attrᵀ ; 1ᵀ] with no concatenate.
    row = jax.lax.broadcasted_iota(jnp.int32, (svb, rows), 0)
    onehot_t = (row == lab_ref[...]).astype(jnp.float32)
    lhs1_t = attr_pad_ref[...] + onehot_t                       # (S+V+1, B*S)

    # Layer 1 (embedding + attr Linear + concat + Linear1 + ReLU), one matmul.
    # The extra pass-through row of wpack keeps a constant 1 in h1ᵀ's last row
    # (relu(1) == 1) so layer 2's bias folds into the next matmul.
    h1_t = jnp.maximum(
        jnp.dot(wpack_ref[...], lhs1_t, preferred_element_type=jnp.float32),
        0.0)                                                    # (s_half+1, B*S)

    # Layer 2 (Linear2, bias folded), one matmul.
    h2_t = jnp.dot(w2pack_ref[...], h1_t,
                   preferred_element_type=jnp.float32)          # (s_quarter, B*S)

    # Sequence output already in (B, s_quarter, split) layout: pure lane slices,
    # no transposes.
    for b in range(batch):
        seq_out_ref[b, :, :] = h2_t[:, b * split:(b + 1) * split]

    # Global mean over the split axis: constant pooling matmul on the MXU,
    # then one tiny (s_quarter, B) -> (B, s_quarter) transpose on the XLU.
    glob_t = jnp.dot(h2_t, pool_ref[...],
                     preferred_element_type=jnp.float32)        # (s_quarter, B)
    glob_out_ref[...] = glob_t.T


# ---- parameter pre-fusion (done once, off the hot path) ----------------------
def prepare_params(params):
    """Exact algebraic fusion of (embedding, attr Linear, concat, Linear1/2 biases)."""
    table, wa, ba, w1, b1, w2, b2 = params
    w1_lab = w1[:LABEL_EMB_NUM, :]                      # (L, s_half)
    w1_att = w1[LABEL_EMB_NUM:, :]                      # (A, s_half)
    w_lab = table @ w1_lab                              # (S, s_half)
    w_attr = BETA * (wa @ w1_att)                       # (V, s_half)
    b_fus = BETA * (ba @ w1_att) + b1                   # (1, s_half)
    wpack = jnp.concatenate([w_lab, w_attr, b_fus], axis=0)      # (S+V+1, s_half)
    wpack_t = wpack.T                                            # (s_half, S+V+1)
    # Extra pass-through row: picks lhs1ᵀ's ones-row so relu(h1ᵀ) carries a
    # constant-1 row that the [w2 | b2]ᵀ matmul multiplies against b2.
    ones_row = jnp.zeros((1, wpack_t.shape[1]), jnp.float32).at[0, -1].set(1.0)
    wpack_ext_t = jnp.concatenate([wpack_t, ones_row], axis=0)   # (s_half+1, S+V+1)
    w2pack_t = jnp.concatenate([w2, b2], axis=0).T               # (s_quarter, s_half+1)
    return wpack_ext_t.astype(jnp.float32), w2pack_t.astype(jnp.float32)


# ---- wrapper -----------------------------------------------------------------
@jax.jit
def _label_encoder_call(label, attr, wpack_ext_t, w2pack_t):
    B, S, V = attr.shape
    rows = B * S
    s_half_p1, svb = wpack_ext_t.shape
    s_quarter = w2pack_t.shape[0]

    # Layout plumbing (tiny, fuses into one XLA fusion; no compute hoisted):
    lab_row = jnp.tile(label.astype(jnp.int32), B)[None, :]          # (1, B*S)
    attr_t = attr.reshape(rows, V).astype(jnp.float32).T             # (V, B*S)
    attr_pad = jnp.concatenate(
        [jnp.zeros((S, rows), jnp.float32), attr_t,
         jnp.ones((1, rows), jnp.float32)], axis=0)                  # (S+V+1, B*S)

    # Constant mean-pooling matrix (compile-time constant under jit).
    r = jax.lax.broadcasted_iota(jnp.int32, (rows, B), 0)
    b = jax.lax.broadcasted_iota(jnp.int32, (rows, B), 1)
    pool_t = jnp.where((r >= b * S) & (r < (b + 1) * S),
                       jnp.float32(1.0 / S), jnp.float32(0.0))       # (B*S, B)

    kernel = functools.partial(label_encoder_kernel, batch=B, split=S)
    vmem = pl.BlockSpec(memory_space=pltpu.MemorySpace.VMEM)

    flops = 2 * rows * (s_half_p1 * svb + s_quarter * s_half_p1 + s_quarter * B)
    bytes_accessed = 4 * (rows + svb * rows + s_half_p1 * svb
                          + s_quarter * s_half_p1 + rows * B
                          + B * s_quarter * S + B * s_quarter)

    seq, glob = pl.pallas_call(
        kernel,
        out_shape=(jax.ShapeDtypeStruct((B, s_quarter, S), jnp.float32),
                   jax.ShapeDtypeStruct((B, s_quarter), jnp.float32)),
        in_specs=[vmem, vmem, vmem, vmem, vmem],
        out_specs=(vmem, vmem),
        cost_estimate=pl.CostEstimate(flops=flops, transcendentals=0,
                                      bytes_accessed=bytes_accessed),
    )(lab_row, attr_pad, wpack_ext_t, w2pack_t, pool_t)
    return seq, glob


def label_encoder_forward(label, attr, prepared):
    """Mirrors LabelEncoder.forward.

    label   : int32 [split_num]
    attr    : float32 [B, split_num, vip_attr_num]
    prepared: output of prepare_params(params)
    returns (concat_emb: [B, s//4, split_num], global_emb: [B, s//4])
    """
    wpack_ext_t, w2pack_t = prepared
    return _label_encoder_call(label, attr, wpack_ext_t, w2pack_t)


# ---- deterministic parameter init (uniform(-0.1, 0.1) like the module) -------
def init_params(key):
    ks = jax.random.split(key, 7)
    u = lambda k, shape: jax.random.uniform(k, shape, jnp.float32, -0.1, 0.1)
    table = u(ks[0], (SPLIT_NUM, LABEL_EMB_NUM))        # label_embedding.weight
    wa = u(ks[1], (VIP_ATTR_NUM, ATT_EMB_NUM))          # attr_embedding (in, out)
    ba = u(ks[2], (1, ATT_EMB_NUM))
    w1 = u(ks[3], (S_EMB_NUM, S_HALF))                  # hidden Linear 1 (in, out)
    b1 = u(ks[4], (1, S_HALF))
    w2 = u(ks[5], (S_HALF, S_QUARTER))                  # hidden Linear 2 (in, out)
    b2 = u(ks[6], (1, S_QUARTER))
    return (table, wa, ba, w1, b1, w2, b2)


# ---- pure-JAX reference (unfused, mirrors the PyTorch module) -----------------
def reference_forward(label, attr, params):
    (table, wa, ba, w1, b1, w2, b2) = params
    B = attr.shape[0]
    label_emb = table[label]                                       # (S, L)
    label_emb = jnp.broadcast_to(label_emb[None], (B, SPLIT_NUM, LABEL_EMB_NUM))
    label_emb = label_emb.reshape(B * SPLIT_NUM, LABEL_EMB_NUM)
    a2d = attr.reshape(B * SPLIT_NUM, VIP_ATTR_NUM)
    attr_emb = a2d @ wa + ba
    concat = jnp.concatenate([label_emb, BETA * attr_emb], axis=1)
    h1 = jnp.maximum(concat @ w1 + b1, 0.0)
    h2 = h1 @ w2 + b2
    h2 = h2.reshape(B, SPLIT_NUM, S_QUARTER)
    return h2.transpose(0, 2, 1), h2.mean(axis=1)


if __name__ == "__main__":
    key = jax.random.PRNGKey(0)
    k_attr, k_lab, k_par = jax.random.split(key, 3)

    attr = jax.random.normal(k_attr, (BATCH, SPLIT_NUM, VIP_ATTR_NUM), jnp.float32)
    label = jax.random.randint(k_lab, (SPLIT_NUM,), 0, SPLIT_NUM, jnp.int32)
    params = init_params(k_par)
    prepared = prepare_params(params)

    concat_emb, global_emb = label_encoder_forward(label, attr, prepared)
    jax.block_until_ready((concat_emb, global_emb))

    ref_concat, ref_global = reference_forward(label, attr, params)
    assert concat_emb.shape == (BATCH, S_QUARTER, SPLIT_NUM)
    assert global_emb.shape == (BATCH, S_QUARTER)
    assert jnp.allclose(concat_emb, ref_concat, atol=1e-3, rtol=1e-3)
    assert jnp.allclose(global_emb, ref_global, atol=1e-3, rtol=1e-3)

    print("KERNEL_OK")
</pallas_src>

<mosaic_0001>
module attributes {stable_mosaic.version = 11 : i64} {
  func.func @label_encoder_kernel(%arg0: memref<1x16xi32, #tpu.memory_space<vmem>>, %arg1: memref<25x16xf32, #tpu.memory_space<vmem>>, %arg2: memref<33x25xf32, #tpu.memory_space<vmem>>, %arg3: memref<16x33xf32, #tpu.memory_space<vmem>>, %arg4: memref<16x2xf32, #tpu.memory_space<vmem>>, %arg5: memref<2x16x8xf32, #tpu.memory_space<vmem>>, %arg6: memref<2x16xf32, #tpu.memory_space<vmem>>) attributes {dimension_semantics = [], scalar_prefetch = 0 : i64, scratch_operands = 0 : i64, tpu.core_type = #tpu.core_type<tc>} {
    %0 = tpu.iota {dimensions = array<i32: 0>} : vector<25x16xi32>
    %c0 = arith.constant 0 : index
    %c0_0 = arith.constant 0 : index
    %1 = vector.load %arg0[%c0, %c0_0] : memref<1x16xi32, #tpu.memory_space<vmem>>, vector<1x16xi32>
    %2 = vector.broadcast %1 : vector<1x16xi32> to vector<25x16xi32>
    %3 = arith.cmpi eq, %0, %2 : vector<25x16xi32>
    %4 = arith.extui %3 : vector<25x16xi1> to vector<25x16xi32>
    %5 = arith.sitofp %4 : vector<25x16xi32> to vector<25x16xf32>
    %c0_1 = arith.constant 0 : index
    %c0_2 = arith.constant 0 : index
    %6 = vector.load %arg1[%c0_1, %c0_2] : memref<25x16xf32, #tpu.memory_space<vmem>>, vector<25x16xf32>
    %7 = arith.addf %6, %5 : vector<25x16xf32>
    %c0_3 = arith.constant 0 : index
    %c0_4 = arith.constant 0 : index
    %8 = vector.load %arg2[%c0_3, %c0_4] : memref<33x25xf32, #tpu.memory_space<vmem>>, vector<33x25xf32>
    %cst = arith.constant dense<0.000000e+00> : vector<33x16xf32>
    %9 = tpu.matmul %8, %7, %cst {dimension_numbers = #tpu.dot_dimension_numbers<[1], [0], [0], [1], [0, 0, 1, 1], [], []>} : vector<33x25xf32>, vector<25x16xf32>, vector<33x16xf32> -> vector<33x16xf32>
    %cst_5 = arith.constant 0.000000e+00 : f32
    %10 = vector.broadcast %cst_5 : f32 to vector<33x16xf32>
    %11 = arith.maximumf %9, %10 : vector<33x16xf32>
    %c0_6 = arith.constant 0 : index
    %c0_7 = arith.constant 0 : index
    %12 = vector.load %arg3[%c0_6, %c0_7] : memref<16x33xf32, #tpu.memory_space<vmem>>, vector<16x33xf32>
    %cst_8 = arith.constant dense<0.000000e+00> : vector<16x16xf32>
    %13 = tpu.matmul %12, %11, %cst_8 {dimension_numbers = #tpu.dot_dimension_numbers<[1], [0], [0], [1], [0, 0, 1, 1], [], []>} : vector<16x33xf32>, vector<33x16xf32>, vector<16x16xf32> -> vector<16x16xf32>
    %14 = vector.extract_strided_slice %13 {offsets = [0, 0], sizes = [16, 8], strides = [1, 1]} : vector<16x16xf32> to vector<16x8xf32>
    %c0_9 = arith.constant 0 : index
    %c0_10 = arith.constant 0 : index
    %c0_11 = arith.constant 0 : index
    %15 = vector.load %arg5[%c0_9, %c0_10, %c0_11] : memref<2x16x8xf32, #tpu.memory_space<vmem>>, vector<1x16x8xf32>
    %16 = vector.shape_cast %15 : vector<1x16x8xf32> to vector<16x8xf32>
    %17 = vector.shape_cast %14 : vector<16x8xf32> to vector<1x16x8xf32>
    tpu.vector_store %arg5[%c0_9, %c0_10, %c0_11], %17 {strides = array<i32>} : memref<2x16x8xf32, #tpu.memory_space<vmem>>, vector<1x16x8xf32>,
    %18 = vector.extract_strided_slice %13 {offsets = [0, 8], sizes = [16, 8], strides = [1, 1]} : vector<16x16xf32> to vector<16x8xf32>
    %c1 = arith.constant 1 : index
    %c0_12 = arith.constant 0 : index
    %c0_13 = arith.constant 0 : index
    %19 = vector.load %arg5[%c1, %c0_12, %c0_13] : memref<2x16x8xf32, #tpu.memory_space<vmem>>, vector<1x16x8xf32>
    %20 = vector.shape_cast %19 : vector<1x16x8xf32> to vector<16x8xf32>
    %21 = vector.shape_cast %18 : vector<16x8xf32> to vector<1x16x8xf32>
    tpu.vector_store %arg5[%c1, %c0_12, %c0_13], %21 {strides = array<i32>} : memref<2x16x8xf32, #tpu.memory_space<vmem>>, vector<1x16x8xf32>,
    %c0_14 = arith.constant 0 : index
    %c0_15 = arith.constant 0 : index
    %22 = vector.load %arg4[%c0_14, %c0_15] : memref<16x2xf32, #tpu.memory_space<vmem>>, vector<16x2xf32>
    %cst_16 = arith.constant dense<0.000000e+00> : vector<16x2xf32>
    %23 = tpu.matmul %13, %22, %cst_16 {dimension_numbers = #tpu.dot_dimension_numbers<[1], [0], [0], [1], [0, 0, 1, 1], [], []>} : vector<16x16xf32>, vector<16x2xf32>, vector<16x2xf32> -> vector<16x2xf32>
    %24 = tpu.transpose %23, [1, 0] : vector<16x2xf32> -> vector<2x16xf32>
    %c0_17 = arith.constant 0 : index
    %c0_18 = arith.constant 0 : index
    %25 = vector.load %arg6[%c0_17, %c0_18] : memref<2x16xf32, #tpu.memory_space<vmem>>, vector<2x16xf32>
    tpu.vector_store %arg6[%c0_17, %c0_18], %24 {strides = array<i32>} : memref<2x16xf32, #tpu.memory_space<vmem>>, vector<2x16xf32>,
    return
  }
}

</mosaic_0001>

<llo_original>
// kernel: tile.8
$region0: #{tile.8}
  #allocation0 [shape = 's32[1]{0}', space=sflag, size = 0x4, scoped, tag = 'scoped memory for tile.8']
  %s0 = inlined_call_operand.vmem [shape: s32[8], index: 0, kind: input, shape index: {}]
  %s1 = inlined_call_operand.vmem [shape: s32[2,8], index: 1, kind: output, shape index: {}]
  // Predicated region
  $region2: #{tile.8} parent=0 // pred_check
    _
  $region3: #{tile.8} parent=0 // pred_check_branch
    %3 = sbr.rel (0) target = $region5
  $region4: #{tile.8} parent=0 // pred_region
    _
  $region5: #{tile.8} parent=0 // pred_fallthru
    _
  %v4 = vld [vmem:[%s0] ss:$0 sm:$0xff]
  %5 = vst [vmem:[%s1] sm:$0x3] %v4

// kernel: tile.9
$region0: #{tile.9}
  %s0 = inlined_call_operand.vmem [shape: s32[2,8], index: 0, kind: input, shape index: {}]
  %s1 = inlined_call_operand.vmem [shape: s32[1,16], index: 1, kind: output, shape index: {}]
  $region1: #{tile.9} parent=0
    #allocation0 [shape = 'u8[4096]{0}', space=vmem, size = 0x1000, scoped, tag = 'scoped mem for output reshape']
    #allocation1 [shape = 'u8[4096]{0}', space=vmem, size = 0x1000, scoped, tag = 'scoped mem for input reshape']
    %s3 = sshll.u32 1, 2
    %s4 = ssub.s32 %s3, 1
    %v5 = vld [vmem:[%s0] sm:%s4]
    %6 = vst [vmem:[#allocation1] sm:%s4] %v5
    %v7 = vld [vmem:[#allocation1] sm:$0x1]
    %vm8 = vcmask 64512
    %9 = vst.msk [vmem:[#allocation0] sm:$0x1] %vm8, %v7
    %s10 = scalar_lea.vmem [#allocation1], 1
    %v11 = vld [vmem:[%s10] sm:$0x1]
    %12 = vrot.lane.b32.xlu0 %v11, 8
    %v13 = vpop.permute.xlu0 %12
    %vm14 = vcmask 130112
    %15 = vst.msk [vmem:[#allocation0] sm:$0x1] %vm14, %v13
    %s17 = sshll.u32 1, 1
    %s18 = ssub.s32 %s17, 1
    %v20 = vld [vmem:[#allocation0] sm:%s18]
    %s21 = sshll.u32 1, 1
    %s22 = ssub.s32 %s21, 1
    %23 = vst [vmem:[%s1] sm:%s22] %v20

// kernel: _label_encoder_call.1
$region0: #{_label_encoder_call.1}
  #allocation0 [shape = 'u32[]', space=smem, size = 0x4, offset = 0x4, fixed_abs, tag = 'smem constant byte address 0x4 - core index']
  #allocation1 [shape = 'u32[144,128]{1,0:T(1,128)}', space=vmem, size = 0x12000, scoped, tag = 'internal scratch']
  %s0 = inlined_call_operand.vmem [shape: s32[1,16], index: 0, kind: input, shape index: {}]
  %s1 = inlined_call_operand.vmem [shape: f32[25,16], index: 1, kind: input, shape index: {}]
  %s2 = inlined_call_operand.vmem [shape: f32[33,25], index: 2, kind: input, shape index: {}]
  %s3 = inlined_call_operand.vmem [shape: f32[16,33], index: 3, kind: input, shape index: {}]
  %s4 = inlined_call_operand.vmem [shape: f32[16,2], index: 4, kind: input, shape index: {}]
  %s5 = inlined_call_operand.vmem [shape: f32[2,16,8], index: 5, kind: output, shape index: {0}]
  %s6 = inlined_call_operand.hbm [shape: f32[2,16], index: 6, kind: output, shape index: {1}]
  %7 = xla_tuple %s5, %s6
  %s8 = sld [smem:[#allocation0]]
  $region38: #{_label_encoder_call.1} parent=0
    _
  %s10 = ssub.s32 1, %s8
  %s11 = scalar_select 0, %s10, %s8
  $region1: #{_label_encoder_call.1} parent=0
    #allocation2 [shape = 'u8[1024]{0}', space=vmem, size = 0x400, scoped, tag = 'output window, operand 1, single buffered']
    #allocation3 [shape = 's32[1]{0}', space=sflag, size = 0x4, scoped, tag = 'scoped memory for _label_encoder_call.1']
    %12 = vsyncpa [#allocation3], 0
    // Predicated region
    $region2: #{_label_encoder_call.1} parent=1 // pred_check
      _
    $region3: #{_label_encoder_call.1} parent=1 // pred_check_branch
      %14 = sbr.rel (0) target = $region5
    $region4: #{_label_encoder_call.1} parent=1 // pred_region
      _
    $region5: #{_label_encoder_call.1} parent=1 // pred_fallthru
      _
    // Predicated region
    $region6: #{_label_encoder_call.1} parent=1 // pred_check
      _
    $region7: #{_label_encoder_call.1} parent=1 // pred_check_branch
      %16 = sbr.rel (0) target = $region9
    $region8: #{_label_encoder_call.1} parent=1 // pred_region
      _
    $region9: #{_label_encoder_call.1} parent=1 // pred_fallthru
      _
    // Predicated region
    $region10: #{_label_encoder_call.1} parent=1 // pred_check
      _
    $region11: #{_label_encoder_call.1} parent=1 // pred_check_branch
      %18 = sbr.rel (0) target = $region13
    $region12: #{_label_encoder_call.1} parent=1 // pred_region
      _
    $region13: #{_label_encoder_call.1} parent=1 // pred_fallthru
      _
    // Predicated region
    $region14: #{_label_encoder_call.1} parent=1 // pred_check
      _
    $region15: #{_label_encoder_call.1} parent=1 // pred_check_branch
      %20 = sbr.rel (0) target = $region17
    $region16: #{_label_encoder_call.1} parent=1 // pred_region
      _
    $region17: #{_label_encoder_call.1} parent=1 // pred_fallthru
      _
    // Predicated region
    $region18: #{_label_encoder_call.1} parent=1 // pred_check
      _
    $region19: #{_label_encoder_call.1} parent=1 // pred_check_branch
      %22 = sbr.rel (0) target = $region21
    $region20: #{_label_encoder_call.1} parent=1 // pred_region
      _
    $region21: #{_label_encoder_call.1} parent=1 // pred_fallthru
      _
    %v23 = vlaneseq
    %v24 = vshrl.u32 %v23, 7
    %v25 = vadd.s32 %v24, 8
    %v26 = vadd.s32 %v24, 16
    %v27 = vadd.s32 %v24, 24
    %v28 = vld [vmem:[%s0] sm:$0x1]
    %v29 = vlaneseq
    %v30 = vshrl.u32 %v29, 7
    %v31 = vsub.s32 0, %v30
    %v32 = vrot.slane %v28, %v31
    %vm33 = vcmp.eq.s32.totalorder %v24, %v32
    %vm34 = vcmp.eq.s32.totalorder %v25, %v32
    %vm35 = vcmp.eq.s32.totalorder %v26, %v32
    %vm36 = vcmp.eq.s32.totalorder %v27, %v32
    %v37 = vsel %vm33, 1, 0
    %v38 = vsel %vm34, 1, 0
    %v39 = vsel %vm35, 1, 0
    %v40 = vsel %vm36, 1, 0
    %v41 = vcvt.s32.f32 %v37
    %v42 = vcvt.s32.f32 %v38
    %v43 = vcvt.s32.f32 %v39
    %v44 = vcvt.s32.f32 %v40
    %v45 = vld [vmem:[%s1] sm:$0xff]
    %v46 = vld [vmem:[%s1 + $0x8] sm:$0xff]
    %v47 = vld [vmem:[%s1 + $0x10] sm:$0xff]
    %v48 = vld [vmem:[%s1 + $0x18] sm:$0x1]
    %v49 = vadd.f32 %v45, %v41
    %v50 = vadd.f32 %v46, %v42
    %v51 = vadd.f32 %v47, %v43
    %v52 = vadd.f32 %v48, %v44
    %v53 = vld [vmem:[%s2] sm:$0xff]
    %v54 = vld [vmem:[%s2 + $0x8] sm:$0xff]
    %v55 = vld [vmem:[%s2 + $0x10] sm:$0xff]
    %v56 = vld [vmem:[%s2 + $0x18] sm:$0xff]
    %v57 = vld [vmem:[%s2 + $0x20] sm:$0x1]
    %vm58 = vcmask 203776
    %v60 = vsel %vm58, %v53, 0
    %v63 = vsel %vm58, %v54, 0
    %v66 = vsel %vm58, %v55, 0
    %v69 = vsel %vm58, %v56, 0
    %v72 = vsel %vm58, %v57, 0
    %vm74 = vcmask 1040384
    %v76 = vsel %vm74, %v52, 0
    %78 = vmatprep.subr.mxu0 0.0
    %79 = vmatpush1.msra.mxu0 0.0
    %80 = vmatprep.subr.mxu0 0.0
    %81 = vmatpush1.msra.mxu0 0.0
    %82 = vmatprep.subr.mxu0 0.0
    %83 = vmatpush1.msra.mxu0 0.0
    %84 = vmatprep.subr.mxu0 0.0
    %85 = vmatpush1.msra.mxu0 0.0
    %86 = vmatprep.subr.mxu0 0.0
    %87 = vmatpush1.msra.mxu0 0.0
    %88 = vmatprep.subr.mxu0 0.0
    %89 = vmatpush1.msra.mxu0 0.0
    %90 = vmatprep.subr.mxu0 0.0
    %91 = vmatpush1.msra.mxu0 0.0
    %92 = vmatprep.subr.mxu0 0.0
    %93 = vmatpush1.msra.mxu0 0.0
    %94 = vmatprep.subr.mxu0 0.0
    %95 = vmatpush1.msra.mxu0 0.0
    %96 = vmatprep.subr.mxu0 0.0
    %97 = vmatpush1.msra.mxu0 0.0
    %98 = vmatprep.subr.mxu0 0.0
    %99 = vmatpush1.msra.mxu0 0.0
    %100 = vmatprep.subr.mxu0 0.0
    %101 = vmatpush1.msra.mxu0 0.0
    %102 = vmatprep.subr.mxu0 0.0
    %103 = vmatpush1.msra.mxu0 %v76
    %104 = vmatprep.subr.mxu0 0.0
    %105 = vmatpush1.msra.mxu0 %v51
    %106 = vmatprep.subr.mxu0 0.0
    %107 = vmatpush1.msra.mxu0 %v50
    %108 = vmatprep.subr.mxu0 0.0
    %109 = vmatpush1.msra.mxu0 %v49
    %110 = vmatprep.subr.mxu0 0.0
    %111 = vmatpush2.msra.mxu0 0.0
    %112 = vmatprep.subr.mxu0 0.0
    %113 = vmatpush2.msra.mxu0 0.0
    %114 = vmatprep.subr.mxu0 0.0
    %115 = vmatpush2.msra.mxu0 0.0
    %116 = vmatprep.subr.mxu0 0.0
    %117 = vmatpush2.msra.mxu0 0.0
    %118 = vmatprep.subr.mxu0 0.0
    %119 = vmatpush2.msra.mxu0 0.0
    %120 = vmatprep.subr.mxu0 0.0
    %121 = vmatpush2.msra.mxu0 0.0
    %122 = vmatprep.subr.mxu0 0.0
    %123 = vmatpush2.msra.mxu0 0.0
    %124 = vmatprep.subr.mxu0 0.0
    %125 = vmatpush2.msra.mxu0 0.0
    %126 = vmatprep.subr.mxu0 0.0
    %127 = vmatpush2.msra.mxu0 0.0
    %128 = vmatprep.subr.mxu0 0.0
    %129 = vmatpush2.msra.mxu0 0.0
    %130 = vmatprep.subr.mxu0 0.0
    %131 = vmatpush2.msra.mxu0 0.0
    %132 = vmatprep.subr.mxu0 0.0
    %133 = vmatpush2.msra.mxu0 0.0
    %134 = vmatprep.subr.mxu0 0.0
    %135 = vmatpush2.msra.mxu0 0.0
    %136 = vmatprep.subr.mxu0 0.0
    %137 = vmatpush2.msra.mxu0 0.0
    %138 = vmatprep.subr.mxu0 0.0
    %139 = vmatpush2.msra.mxu0 0.0
    %140 = vmatprep.subr.mxu0 0.0
    %141 = vmatpush2.msra.mxu0 0.0
    %142 = vmatprep.mubr.f32.mxu0 0.0
    %143 = vmatmul.mubr.f32.gmra.mxu0 %v60
    %v144 = vpop.f32.mrf.mxu0
    %v145 = vadd.f32 0.0, %v144
    %v146 = vpop.f32.mrf.mxu0
    %147 = vmatprep.mubr.f32.mxu0 0.0
    %148 = vmatmul.mubr.f32.gmra.mxu0 %v63
    %v149 = vpop.f32.mrf.mxu0
    %v150 = vadd.f32 0.0, %v149
    %v151 = vpop.f32.mrf.mxu0
    %152 = vmatprep.mubr.f32.mxu0 0.0
    %153 = vmatmul.mubr.f32.gmra.mxu0 %v66
    %v154 = vpop.f32.mrf.mxu0
    %v155 = vadd.f32 0.0, %v154
    %v156 = vpop.f32.mrf.mxu0
    %157 = vmatprep.mubr.f32.mxu0 0.0
    %158 = vmatmul.mubr.f32.gmra.mxu0 %v69
    %v159 = vpop.f32.mrf.mxu0
    %v160 = vadd.f32 0.0, %v159
    %v161 = vpop.f32.mrf.mxu0
    %162 = vmatprep.mubr.f32.mxu0 0.0
    %163 = vmatmul.mubr.f32.gmra.mxu0 %v72
    %v164 = vpop.f32.mrf.mxu0
    %v165 = vadd.f32 0.0, %v164
    %v166 = vpop.f32.mrf.mxu0
    %167 = vdwg.mxu0
    %v168 = vmax.f32 %v145, 0.0
    %v169 = vmax.f32 %v150, 0.0
    %v170 = vmax.f32 %v155, 0.0
    %v171 = vmax.f32 %v160, 0.0
    %v172 = vmax.f32 %v165, 0.0
    %v173 = vld [vmem:[%s3] sm:$0xff]
    %v174 = vld [vmem:[%s3 + $0x8] sm:$0xff]
    %vm175 = vcmask 269312
    %v177 = vsel %vm175, %v173, 0
    %v180 = vsel %vm175, %v174, 0
    %v183 = vsel %vm74, %v172, 0
    %185 = vmatprep.subr.mxu0 0.0
    %186 = vmatpush1.msra.mxu0 0.0
    %187 = vmatprep.subr.mxu0 0.0
    %188 = vmatpush1.msra.mxu0 0.0
    %189 = vmatprep.subr.mxu0 0.0
    %190 = vmatpush1.msra.mxu0 0.0
    %191 = vmatprep.subr.mxu0 0.0
    %192 = vmatpush1.msra.mxu0 0.0
    %193 = vmatprep.subr.mxu0 0.0
    %194 = vmatpush1.msra.mxu0 0.0
    %195 = vmatprep.subr.mxu0 0.0
    %196 = vmatpush1.msra.mxu0 0.0
    %197 = vmatprep.subr.mxu0 0.0
    %198 = vmatpush1.msra.mxu0 0.0
    %199 = vmatprep.subr.mxu0 0.0
    %200 = vmatpush1.msra.mxu0 0.0
    %201 = vmatprep.subr.mxu0 0.0
    %202 = vmatpush1.msra.mxu0 0.0
    %203 = vmatprep.subr.mxu0 0.0
    %204 = vmatpush1.msra.mxu0 0.0
    %205 = vmatprep.subr.mxu0 0.0
    %206 = vmatpush1.msra.mxu0 0.0
    %207 = vmatprep.subr.mxu0 0.0
    %208 = vmatpush1.msra.mxu0 %v183
    %209 = vmatprep.subr.mxu0 0.0
    %210 = vmatpush1.msra.mxu0 %v171
    %211 = vmatprep.subr.mxu0 0.0
    %212 = vmatpush1.msra.mxu0 %v170
    %213 = vmatprep.subr.mxu0 0.0
    %214 = vmatpush1.msra.mxu0 %v169
    %215 = vmatprep.subr.mxu0 0.0
    %216 = vmatpush1.msra.mxu0 %v168
    %217 = vmatprep.subr.mxu0 0.0
    %218 = vmatpush2.msra.mxu0 0.0
    %219 = vmatprep.subr.mxu0 0.0
    %220 = vmatpush2.msra.mxu0 0.0
    %221 = vmatprep.subr.mxu0 0.0
    %222 = vmatpush2.msra.mxu0 0.0
    %223 = vmatprep.subr.mxu0 0.0
    %224 = vmatpush2.msra.mxu0 0.0
    %225 = vmatprep.subr.mxu0 0.0
    %226 = vmatpush2.msra.mxu0 0.0
    %227 = vmatprep.subr.mxu0 0.0
    %228 = vmatpush2.msra.mxu0 0.0
    %229 = vmatprep.subr.mxu0 0.0
    %230 = vmatpush2.msra.mxu0 0.0
    %231 = vmatprep.subr.mxu0 0.0
    %232 = vmatpush2.msra.mxu0 0.0
    %233 = vmatprep.subr.mxu0 0.0
    %234 = vmatpush2.msra.mxu0 0.0
    %235 = vmatprep.subr.mxu0 0.0
    %236 = vmatpush2.msra.mxu0 0.0
    %237 = vmatprep.subr.mxu0 0.0
    %238 = vmatpush2.msra.mxu0 0.0
    %239 = vmatprep.subr.mxu0 0.0
    %240 = vmatpush2.msra.mxu0 0.0
    %241 = vmatprep.subr.mxu0 0.0
    %242 = vmatpush2.msra.mxu0 0.0
    %243 = vmatprep.subr.mxu0 0.0
    %244 = vmatpush2.msra.mxu0 0.0
    %245 = vmatprep.subr.mxu0 0.0
    %246 = vmatpush2.msra.mxu0 0.0
    %247 = vmatprep.subr.mxu0 0.0
    %248 = vmatpush2.msra.mxu0 0.0
    %249 = vmatprep.mubr.f32.mxu0 0.0
    %250 = vmatmul.mubr.f32.gmra.mxu0 %v177
    %v251 = vpop.f32.mrf.mxu0
    %v252 = vadd.f32 0.0, %v251
    %v253 = vpop.f32.mrf.mxu0
    %254 = vmatprep.mubr.f32.mxu0 0.0
    %255 = vmatmul.mubr.f32.gmra.mxu0 %v180
    %v256 = vpop.f32.mrf.mxu0
    %v257 = vadd.f32 0.0, %v256
    %v258 = vpop.f32.mrf.mxu0
    %259 = vdwg.mxu0
    %vm260 = vcmask 64512
    %261 = vst.msk [vmem:[%s5] sm:$0xff] %vm260, %v252
    %262 = vst.msk [vmem:[%s5 + $0x8] sm:$0xff] %vm260, %v257
    %265 = vrot.lane.b32.xlu0 %v252, 120
    %v266 = vpop.permute.xlu0 %265
    %267 = vrot.lane.b32.xlu0 %v257, 120
    %v268 = vpop.permute.xlu0 %267
    %s271 = scalar_lea.vmem %s5, 16
    %272 = vst.msk [vmem:[%s271] sm:$0xff] %vm260, %v266
    %273 = vst.msk [vmem:[%s271 + $0x8] sm:$0xff] %vm260, %v268
    %v274 = vld [vmem:[%s4] sm:$0xff]
    %v275 = vld [vmem:[%s4 + $0x8] sm:$0xff]
    %vm276 = vcmask 130048
    %v277 = vsel %vm276, %v252, 0
    %v279 = vsel %vm276, %v257, 0
    %281 = vmatprep.subr.mxu0 0.0
    %282 = vmatpush1.msra.mxu0 0.0
    %283 = vmatprep.subr.mxu0 0.0
    %284 = vmatpush1.msra.mxu0 0.0
    %285 = vmatprep.subr.mxu0 0.0
    %286 = vmatpush1.msra.mxu0 0.0
    %287 = vmatprep.subr.mxu0 0.0
    %288 = vmatpush1.msra.mxu0 0.0
    %289 = vmatprep.subr.mxu0 0.0
    %290 = vmatpush1.msra.mxu0 0.0
    %291 = vmatprep.subr.mxu0 0.0
    %292 = vmatpush1.msra.mxu0 0.0
    %293 = vmatprep.subr.mxu0 0.0
    %294 = vmatpush1.msra.mxu0 0.0
    %295 = vmatprep.subr.mxu0 0.0
    %296 = vmatpush1.msra.mxu0 0.0
    %297 = vmatprep.subr.mxu0 0.0
    %298 = vmatpush1.msra.mxu0 0.0
    %299 = vmatprep.subr.mxu0 0.0
    %300 = vmatpush1.msra.mxu0 0.0
    %301 = vmatprep.subr.mxu0 0.0
    %302 = vmatpush1.msra.mxu0 0.0
    %303 = vmatprep.subr.mxu0 0.0
    %304 = vmatpush1.msra.mxu0 0.0
    %305 = vmatprep.subr.mxu0 0.0
    %306 = vmatpush1.msra.mxu0 0.0
    %307 = vmatprep.subr.mxu0 0.0
    %308 = vmatpush1.msra.mxu0 0.0
    %309 = vmatprep.subr.mxu0 0.0
    %310 = vmatpush1.msra.mxu0 %v275
    %311 = vmatprep.subr.mxu0 0.0
    %312 = vmatpush1.msra.mxu0 %v274
    %313 = vmatprep.subr.mxu0 0.0
    %314 = vmatpush2.msra.mxu0 0.0
    %315 = vmatprep.subr.mxu0 0.0
    %316 = vmatpush2.msra.mxu0 0.0
    %317 = vmatprep.subr.mxu0 0.0
    %318 = vmatpush2.msra.mxu0 0.0
    %319 = vmatprep.subr.mxu0 0.0
    %320 = vmatpush2.msra.mxu0 0.0
    %321 = vmatprep.subr.mxu0 0.0
    %322 = vmatpush2.msra.mxu0 0.0
    %323 = vmatprep.subr.mxu0 0.0
    %324 = vmatpush2.msra.mxu0 0.0
    %325 = vmatprep.subr.mxu0 0.0
    %326 = vmatpush2.msra.mxu0 0.0
    %327 = vmatprep.subr.mxu0 0.0
    %328 = vmatpush2.msra.mxu0 0.0
    %329 = vmatprep.subr.mxu0 0.0
    %330 = vmatpush2.msra.mxu0 0.0
    %331 = vmatprep.subr.mxu0 0.0
    %332 = vmatpush2.msra.mxu0 0.0
    %333 = vmatprep.subr.mxu0 0.0
    %334 = vmatpush2.msra.mxu0 0.0
    %335 = vmatprep.subr.mxu0 0.0
    %336 = vmatpush2.msra.mxu0 0.0
    %337 = vmatprep.subr.mxu0 0.0
    %338 = vmatpush2.msra.mxu0 0.0
    %339 = vmatprep.subr.mxu0 0.0
    %340 = vmatpush2.msra.mxu0 0.0
    %341 = vmatprep.subr.mxu0 0.0
    %342 = vmatpush2.msra.mxu0 0.0
    %343 = vmatprep.subr.mxu0 0.0
    %344 = vmatpush2.msra.mxu0 0.0
    %345 = vmatprep.mubr.f32.mxu0 0.0
    %346 = vmatmul.mubr.f32.gmra.mxu0 %v277
    %v347 = vpop.f32.mrf.mxu0
    %v348 = vadd.f32 0.0, %v347
    %v349 = vpop.f32.mrf.mxu0
    %350 = vmatprep.mubr.f32.mxu0 0.0
    %351 = vmatmul.mubr.f32.gmra.mxu0 %v279
    %v352 = vpop.f32.mrf.mxu0
    %v353 = vadd.f32 0.0, %v352
    %v354 = vpop.f32.mrf.mxu0
    %355 = vdwg.mxu0
    %356 = vxpose.xlu0.b32.start [1/16] %v348, 128
    %357 = vxpose.xlu0.b32.cont [2/16] %v353, 128
    %358 = vxpose.xlu0.b32.cont [3/16] 0.0, 128
    %359 = vxpose.xlu0.b32.cont [4/16] 0.0, 128
    %360 = vxpose.xlu0.b32.cont [5/16] 0.0, 128
    %361 = vxpose.xlu0.b32.cont [6/16] 0.0, 128
    %362 = vxpose.xlu0.b32.cont [7/16] 0.0, 128
    %363 = vxpose.xlu0.b32.cont [8/16] 0.0, 128
    %364 = vxpose.xlu0.b32.cont [9/16] 0.0, 128
    %365 = vxpose.xlu0.b32.cont [10/16] 0.0, 128
    %366 = vxpose.xlu0.b32.cont [11/16] 0.0, 128
    %367 = vxpose.xlu0.b32.cont [12/16] 0.0, 128
    %368 = vxpose.xlu0.b32.cont [13/16] 0.0, 128
    %369 = vxpose.xlu0.b32.cont [14/16] 0.0, 128
    %370 = vxpose.xlu0.b32.cont [15/16] 0.0, 128
    %371 = vxpose.xlu0.b32.end [16/16] 0.0, 128
    %v372 = vpop.trf.xlu0
    %v373 = vpop.trf.xlu0
    %v374 = vpop.trf.xlu0
    %v375 = vpop.trf.xlu0
    %v376 = vpop.trf.xlu0
    %v377 = vpop.trf.xlu0
    %v378 = vpop.trf.xlu0
    %v379 = vpop.trf.xlu0
    %v380 = vpop.trf.xlu0
    %v381 = vpop.trf.xlu0
    %v382 = vpop.trf.xlu0
    %v383 = vpop.trf.xlu0
    %v384 = vpop.trf.xlu0
    %v385 = vpop.trf.xlu0
    %v386 = vpop.trf.xlu0
    %v387 = vpop.trf.xlu0
    %vm388 = vcmask 123904
    %389 = vst.msk [vmem:[#allocation2] sm:$0x3] %vm388, %v372
    // Predicated region
    $region22: #{_label_encoder_call.1} parent=1 // pred_check
      _
    $region23: #{_label_encoder_call.1} parent=1 // pred_check_branch
      %391 = sbr.rel (0) target = $region25
    $region24: #{_label_encoder_call.1} parent=1 // pred_region
      _
    $region25: #{_label_encoder_call.1} parent=1 // pred_fallthru
      _
    // Predicated region
    $region26: #{_label_encoder_call.1} parent=1 // pred_check
      _
    $region27: #{_label_encoder_call.1} parent=1 // pred_check_branch
      %393 = sbr.rel (0) target = $region29
    $region28: #{_label_encoder_call.1} parent=1 // pred_region
      %s395 = ssub.s32 32, 32
      %396 = vsyncadd [#allocation3], %s395
      %s398 = sshll.u32 [#allocation2], 4
      %s399 = int_to_ptr.vmem [resolvable:$true] %s398
      %401 = dma.vmem_to_hbm [thread:$0]  %s399, 32, %s6, [#allocation3]
    $region29: #{_label_encoder_call.1} parent=1 // pred_fallthru
      _
    // Predicated region
    $region30: #{_label_encoder_call.1} parent=1 // pred_check
      _
    $region31: #{_label_encoder_call.1} parent=1 // pred_check_branch
      %403 = sbr.rel (0) target = $region33
    $region32: #{_label_encoder_call.1} parent=1 // pred_region
      _
    $region33: #{_label_encoder_call.1} parent=1 // pred_fallthru
      _
    // Predicated region
    $region34: #{_label_encoder_call.1} parent=1 // pred_check
      _
    $region35: #{_label_encoder_call.1} parent=1 // pred_check_branch
      %405 = sbr.rel (0) target = $region37
    $region36: #{_label_encoder_call.1} parent=1 // pred_region
      %406 = dma.done [#allocation3], 32
    $region37: #{_label_encoder_call.1} parent=1 // pred_fallthru
      _
    %407 = vsyncpa [#allocation3], 1

</llo_original>
